<compile_context>
chip_gen: v7x
topology: tpu7x:2x2x1
jax: 0.10.0
libtpu: 0.0.40
codegen_flags: <defaults>
</compile_context>

<pallas_src>
import functools

import jax
import jax.numpy as jnp
from jax.experimental import pallas as pl
from jax.experimental.pallas import tpu as pltpu


# ---------------------------------------------------------------------------
# Kernels
# ---------------------------------------------------------------------------

def _senet_kernel(x_ref, w1_ref, b1_ref, w2_ref, b2_ref, o_ref):
    """Single-pass SE block: squeeze -> excitation -> scale for one batch block.

    x_ref : (Nb, Ceff, HWeff)  activation block (native dtype)
    w1_ref: (Ceff, hidden)     fc1 weight (pre-transposed; BN1 scale & 1/HW folded)
    b1_ref: (1, hidden)        folded BN1 shift
    w2_ref: (hidden, Ceff)     fc2 weight (pre-transposed; BN2 scale folded)
    b2_ref: (1, Ceff)          folded BN2 shift
    """
    # Squeeze: spatial sum with the f32 accumulation fused into the reduce
    # (no persistent f32 copy of the activation block).
    pool = jnp.sum(x_ref[...], axis=-1, dtype=jnp.float32)               # (Nb, Ceff)

    # Excitation: Linear + folded BN + Hardtanh(0,4), Linear + folded BN + Sigmoid.
    h = jnp.dot(pool, w1_ref[...], preferred_element_type=jnp.float32)   # (Nb, hidden)
    h = jnp.clip(h + b1_ref[...], 0.0, 4.0)
    o = jnp.dot(h, w2_ref[...], preferred_element_type=jnp.float32)      # (Nb, Ceff)
    gate = jax.nn.sigmoid(o + b2_ref[...])                               # (Nb, Ceff)

    # Scale: channel-wise gating of the original activation in its native dtype.
    o_ref[...] = x_ref[...] * gate.astype(o_ref.dtype)[:, :, None]


def _senet_gate_kernel(x_ref, w1_ref, b1_ref, w2_ref, b2_ref, gate_ref, h_ref):
    """Two-pass fallback, pass 1: per-sample gate with channels tiled as a
    reduction axis; the partial pool is folded straight into the fc1
    accumulator so no full (N, Ceff) pool is ever materialised.

    x_ref   : (1, c_tile, HWeff)   activation tile
    w1_ref  : (c_tile, hidden)     fc1 rows for this channel tile
    gate_ref: (1, 1, Ceff)         gate output (written at the last channel step)
    h_ref   : (1, hidden) f32      fc1 accumulator scratch
    """
    c = pl.program_id(1)

    @pl.when(c == 0)
    def _():
        h_ref[...] = jnp.zeros_like(h_ref)

    pool = jnp.sum(x_ref[...], axis=-1, dtype=jnp.float32)               # (1, c_tile)
    h_ref[...] += jnp.dot(pool, w1_ref[...], preferred_element_type=jnp.float32)

    @pl.when(c == pl.num_programs(1) - 1)
    def _():
        h = jnp.clip(h_ref[...] + b1_ref[...], 0.0, 4.0)                  # (1, hidden)
        o = jnp.dot(h, w2_ref[...], preferred_element_type=jnp.float32)   # (1, Ceff)
        gate_ref[...] = jax.nn.sigmoid(o + b2_ref[...])[:, None, :]       # (1, 1, Ceff)


def _senet_scale_kernel(x_ref, gate_ref, o_ref):
    """Two-pass fallback, pass 2: lane-dense elementwise gating sweep.

    x_ref   : (1, c_tile, HWeff)   gate_ref: (1, c_tile, 1) f32
    """
    o_ref[...] = x_ref[...] * gate_ref[...].astype(o_ref.dtype)


# ---------------------------------------------------------------------------
# Helpers
# ---------------------------------------------------------------------------

def fold_bn(gamma, beta, running_mean, running_var, eps=1e-5):
    """Fold eval-mode BatchNorm1d into per-feature (scale, shift) vectors."""
    scale = gamma / jnp.sqrt(running_var + eps)
    shift = beta - running_mean * scale
    return scale, shift


def _resident_spec(block_shape, index_map):
    """BlockSpec for a constant-index operand: single-buffered when supported
    (its block never changes, so a second pipeline buffer is pure waste)."""
    buffered = getattr(pl, "Buffered", None)
    if buffered is not None:
        try:
            return pl.BlockSpec(block_shape, index_map, pipeline_mode=buffered(1))
        except TypeError:
            pass
    return pl.BlockSpec(block_shape, index_map)


def _vmem_capacity_bytes():
    """Per-TensorCore VMEM capacity; device_kind-aware fallback when
    get_tpu_info is unavailable (v7x: 64 MiB, v4/v5e/v5p/v6e: 128 MiB)."""
    get_info = getattr(pltpu, "get_tpu_info", None)
    if get_info is not None:
        try:
            cap = getattr(get_info(), "vmem_capacity_bytes", None)
            if cap:
                return int(cap)
        except Exception:
            pass
    try:
        kind = jax.devices()[0].device_kind.lower()
    except Exception:
        kind = ""
    if "v7" in kind:
        return 64 << 20
    if any(tag in kind for tag in ("v4", "v5", "v6")):
        return 128 << 20
    return 64 << 20  # conservative for unknown / future parts


def _pick_fold(C, HW, sublane):
    """Fold factor f (dividing HW) for the contiguous view (C, HW) -> (C*f, HW//f).

    Priorities: lane-dense last dim (multiple of 128, else >= 128), then
    sublane-aligned channel dim, then the smallest fold (least replication)."""
    best, best_score = 1, None
    for f in range(1, HW + 1):
        if HW % f:
            continue
        ceff, hweff = C * f, HW // f
        lane_bad = 0 if hweff % 128 == 0 else (1 if hweff >= 128 else 2)
        sub_bad = 0 if ceff % sublane == 0 else 1
        score = (lane_bad, sub_bad, f)
        if best_score is None or score < best_score:
            best, best_score = f, score
    return best


def _pick_batch_block(n, per_elem_bytes, act_budget_bytes):
    """Batch-block size for the single-pass kernel.

    Targets: double-buffered in+out blocks within the VMEM activation budget,
    >= 8 grid steps (>= 4 per TensorCore on v7x) when the batch allows it,
    roughly 2-8 MiB blocks, an even total step count (two TCs on v7x), and a
    mild preference for a full final block."""
    nb_cap = max(1, min(act_budget_bytes // (4 * per_elem_bytes),
                        max(1, (8 << 20) // per_elem_bytes),
                        n))
    min_steps = min(n, 8)
    best, best_score = 1, None
    for nb in range(1, nb_cap + 1):
        steps = -(-n // nb)
        score = (
            max(0, min_steps - steps),                                        # enough steps
            0 if (nb * per_elem_bytes >= (2 << 20) or nb == nb_cap) else 1,   # ~2 MiB+ blocks
            0 if (steps % 2 == 0 or n == 1) else 1,                           # even for 2 TCs
            0 if n % nb == 0 else 1,                                          # full last block
            -nb,                                                              # fewer steps
        )
        if best_score is None or score < best_score:
            best, best_score = nb, score
    return best


def _pick_channel_tile(ceff, hweff, dsize, act_budget_bytes, sublane):
    """Channel-tile for the two-pass fallback: c_tile | Ceff, sublane aligned,
    double-buffered x tile within the activation budget and <= ~8 MiB."""
    per_row = hweff * dsize
    cap = min(max(1, act_budget_bytes // (4 * per_row)),
              max(1, (8 << 20) // per_row),
              ceff)
    step = sublane if ceff % sublane == 0 else (8 if ceff % 8 == 0 else 1)
    if step == 1:
        # No 8-aligned divisor exists; (c_tile, 1) blocks need c_tile % 8 == 0 or
        # c_tile == Ceff, so fall back to the full channel dim.
        return ceff
    candidates = [ct for ct in range(step, cap + 1, step) if ceff % ct == 0]
    return candidates[-1] if candidates else step


# ---------------------------------------------------------------------------
# Wrapper
# ---------------------------------------------------------------------------

@functools.partial(
    jax.jit, static_argnames=("force_two_pass", "max_block_kib", "alias_input"))
def senet_block(x, w1, s1, b1, w2, s2, b2, *, force_two_pass=False,
                max_block_kib=None, alias_input=True):
    """SenetBlock forward (eval-mode BN) as Pallas TPU kernel(s).

    x : (N, C, H, W) activations (any float dtype)
    w1: (hidden, C)  fc1 weight;  s1/b1: folded BN1 scale/shift (hidden,)
    w2: (C, hidden)  fc2 weight;  s2/b2: folded BN2 scale/shift (C,)
    alias_input : write the gated output in place of x (only a genuine win when
                  the caller's buffer is donatable; otherwise XLA adds a copy).
    """
    N, C, H, W = x.shape
    hidden = w1.shape[0]
    HW = H * W
    dsize = jnp.dtype(x.dtype).itemsize
    sublane = 8 * (4 // dsize)          # 8 (f32), 16 (bf16), 32 (int8/fp8)

    # Layout: fold spatial into channel so the channel (sublane) dim is aligned
    # and the last (lane) dim stays a multiple of 128 where possible;
    # (N, C, HW) -> (N, C*f, HW//f) is a contiguous (free) view.
    fold = _pick_fold(C, HW, sublane)
    Ceff, HWeff = C * fold, HW // fold
    x3 = x.reshape(N, Ceff, HWeff)

    # Bake every affine constant into the two weight matrices (once, in the
    # wrapper): 1/HW pooling scale, folded BN scales s1/s2, fold replication.
    f32 = jnp.float32
    w1_eff = w1.astype(f32).T * s1.astype(f32)[None, :]                   # (C, hidden)
    w1_eff = jnp.repeat(w1_eff, fold, axis=0) / float(HW)                 # (Ceff, hidden)
    b1_eff = b1.astype(f32).reshape(1, hidden)                            # (1, hidden)
    w2_eff = jnp.repeat(w2.astype(f32).T * s2.astype(f32)[None, :],
                        fold, axis=1)                                     # (hidden, Ceff)
    b2_eff = jnp.repeat(b2.astype(f32), fold).reshape(1, Ceff)            # (1, Ceff)

    # VMEM budget (generation aware); leave room for weights + compiler scratch.
    vmem_cap = _vmem_capacity_bytes()
    vmem_limit = int(min(vmem_cap * 3 // 4, 96 << 20))
    weight_bytes = 4 * (w1_eff.size + b1_eff.size + w2_eff.size + b2_eff.size)
    act_budget = max(1 << 20, vmem_limit - 2 * weight_bytes - (4 << 20))
    if max_block_kib is not None:
        act_budget = min(act_budget, int(max_block_kib) << 10)

    per_elem = Ceff * HWeff * dsize
    flops = int(2 * N * Ceff * HWeff + 4 * N * Ceff * hidden)
    transcendentals = int(N * Ceff)
    io_aliases = {0: 0} if alias_input else {}

    if not force_two_pass and 4 * per_elem <= act_budget:
        # ------------------------------------------------------------------
        # Single pass: one batch block per grid step.
        # ------------------------------------------------------------------
        Nb = _pick_batch_block(N, per_elem, act_budget)
        steps = pl.cdiv(N, Nb)        # partial last block is masked by Pallas
        out = pl.pallas_call(
            _senet_kernel,
            out_shape=jax.ShapeDtypeStruct((N, Ceff, HWeff), x.dtype),
            grid_spec=pltpu.PrefetchScalarGridSpec(
                num_scalar_prefetch=0,
                grid=(steps,),
                in_specs=[
                    pl.BlockSpec((Nb, Ceff, HWeff), lambda n: (n, 0, 0)),
                    _resident_spec((Ceff, hidden), lambda n: (0, 0)),
                    _resident_spec((1, hidden), lambda n: (0, 0)),
                    _resident_spec((hidden, Ceff), lambda n: (0, 0)),
                    _resident_spec((1, Ceff), lambda n: (0, 0)),
                ],
                out_specs=pl.BlockSpec((Nb, Ceff, HWeff), lambda n: (n, 0, 0)),
            ),
            compiler_params=pltpu.CompilerParams(
                dimension_semantics=("parallel",),
                vmem_limit_bytes=vmem_limit,
            ),
            input_output_aliases=io_aliases,
            cost_estimate=pl.CostEstimate(
                flops=flops, transcendentals=transcendentals,
                bytes_accessed=int(2 * N * per_elem + weight_bytes)),
        )(x3, w1_eff, b1_eff, w2_eff, b2_eff)
        return out.reshape(N, C, H, W)

    # ----------------------------------------------------------------------
    # Two-pass fallback: a single sample's blocks cannot fit VMEM, and the gate
    # needs the full spatial pool before any output element can be produced.
    # ----------------------------------------------------------------------
    c_tile = _pick_channel_tile(Ceff, HWeff, dsize, act_budget, sublane)
    ncb = Ceff // c_tile

    gate = pl.pallas_call(
        _senet_gate_kernel,
        out_shape=jax.ShapeDtypeStruct((N, 1, Ceff), jnp.float32),
        grid_spec=pltpu.PrefetchScalarGridSpec(
            num_scalar_prefetch=0,
            grid=(N, ncb),
            in_specs=[
                pl.BlockSpec((1, c_tile, HWeff), lambda b, c: (b, c, 0)),
                pl.BlockSpec((c_tile, hidden), lambda b, c: (c, 0)),
                _resident_spec((1, hidden), lambda b, c: (0, 0)),
                _resident_spec((hidden, Ceff), lambda b, c: (0, 0)),
                _resident_spec((1, Ceff), lambda b, c: (0, 0)),
            ],
            out_specs=pl.BlockSpec((1, 1, Ceff), lambda b, c: (b, 0, 0)),
            scratch_shapes=[pltpu.VMEM((1, hidden), jnp.float32)],
        ),
        compiler_params=pltpu.CompilerParams(
            dimension_semantics=("parallel", "arbitrary"),
            vmem_limit_bytes=vmem_limit,
        ),
        cost_estimate=pl.CostEstimate(
            flops=int(N * Ceff * HWeff + 4 * N * Ceff * hidden),
            transcendentals=transcendentals,
            bytes_accessed=int(N * per_elem + weight_bytes)),
    )(x3, w1_eff, b1_eff, w2_eff, b2_eff)

    gate_col = gate.reshape(N, Ceff, 1)     # free: (N, 1, Ceff) -> (N, Ceff, 1)

    out = pl.pallas_call(
        _senet_scale_kernel,
        out_shape=jax.ShapeDtypeStruct((N, Ceff, HWeff), x.dtype),
        grid_spec=pltpu.PrefetchScalarGridSpec(
            num_scalar_prefetch=0,
            grid=(N, ncb),
            in_specs=[
                pl.BlockSpec((1, c_tile, HWeff), lambda b, c: (b, c, 0)),
                pl.BlockSpec((1, c_tile, 1), lambda b, c: (b, c, 0)),
            ],
            out_specs=pl.BlockSpec((1, c_tile, HWeff), lambda b, c: (b, c, 0)),
        ),
        compiler_params=pltpu.CompilerParams(
            dimension_semantics=("parallel", "parallel"),
            vmem_limit_bytes=vmem_limit,
        ),
        input_output_aliases=io_aliases,
        cost_estimate=pl.CostEstimate(
            flops=int(N * Ceff * HWeff), transcendentals=0,
            bytes_accessed=int(2 * N * per_elem)),
    )(x3, gate_col)
    return out.reshape(N, C, H, W)


# ---------------------------------------------------------------------------
# Reference + self-test
# ---------------------------------------------------------------------------

def senet_reference(x, w1, s1, b1, w2, s2, b2):
    """Pure-JAX reference of the same (eval-mode) forward pass."""
    pool = x.mean(axis=(2, 3))                                            # (N, C)
    h = jnp.clip((pool @ w1.T) * s1 + b1, 0.0, 4.0)                       # (N, hidden)
    o = (h @ w2.T) * s2 + b2                                              # (N, C)
    gate = jax.nn.sigmoid(o)
    return x * gate[:, :, None, None]


def _make_params(C, key):
    """Deterministic synthetic Linear + eval-mode BN parameters."""
    hidden = min(C // 2, 256)
    k1, k2 = jax.random.split(key)
    w1 = jax.random.normal(k1, (hidden, C), dtype=jnp.float32) / jnp.sqrt(C)
    w2 = jax.random.normal(k2, (C, hidden), dtype=jnp.float32) / jnp.sqrt(hidden)

    g1 = 1.0 + 0.1 * jnp.arange(hidden, dtype=jnp.float32)
    be1 = 0.05 * jnp.arange(hidden, dtype=jnp.float32)
    rm1 = 0.01 * jnp.arange(hidden, dtype=jnp.float32)
    rv1 = 1.0 + 0.02 * jnp.arange(hidden, dtype=jnp.float32)

    g2 = 1.0 - 0.05 * jnp.arange(C, dtype=jnp.float32)
    be2 = -0.03 * jnp.arange(C, dtype=jnp.float32)
    rm2 = 0.02 * jnp.arange(C, dtype=jnp.float32)
    rv2 = 1.0 + 0.01 * jnp.arange(C, dtype=jnp.float32)

    s1, b1 = fold_bn(g1, be1, rm1, rv1)
    s2, b2 = fold_bn(g2, be2, rm2, rv2)
    return w1, s1, b1, w2, s2, b2


if __name__ == "__main__":
    key = jax.random.PRNGKey(0)
    kx1, kx2, kp1, kp2 = jax.random.split(key, 4)

    # 1) Single-pass path, f32, module-sized shapes (channel=4, size=16).
    N, C, H, W = 2, 4, 16, 16
    x = jax.random.normal(kx1, (N, C, H, W), dtype=jnp.float32)
    params = _make_params(C, kp1)
    out = jax.block_until_ready(senet_block(x, *params))
    ref = senet_reference(x, *params)
    assert out.shape == (N, C, H, W)
    err = jnp.max(jnp.abs(out - ref))
    assert jnp.allclose(out, ref, atol=1e-5, rtol=1e-4), f"f32 max abs err = {err}"

    # 2) Single-pass path, bf16 storage dtype (gating runs in bf16).
    xb = x.astype(jnp.bfloat16)
    outb = jax.block_until_ready(senet_block(xb, *params))
    refb = senet_reference(xb.astype(jnp.float32), *params)
    errb = jnp.max(jnp.abs(outb.astype(jnp.float32) - refb))
    assert jnp.allclose(outb.astype(jnp.float32), refb, atol=5e-2, rtol=5e-2), (
        f"bf16 max abs err = {errb}")

    # 3) Two-pass fallback (forced, tiny block budget so channels actually tile).
    N2, C2 = 2, 32
    x2 = jax.random.normal(kx2, (N2, C2, H, W), dtype=jnp.float32)
    params2 = _make_params(C2, kp2)
    out2 = jax.block_until_ready(
        senet_block(x2, *params2, force_two_pass=True, max_block_kib=16))
    ref2 = senet_reference(x2, *params2)
    assert out2.shape == (N2, C2, H, W)
    err2 = jnp.max(jnp.abs(out2 - ref2))
    assert jnp.allclose(out2, ref2, atol=1e-5, rtol=1e-4), (
        f"two-pass f32 max abs err = {err2}")

    print("KERNEL_OK")
</pallas_src>

<mosaic_0001>
module attributes {stable_mosaic.version = 11 : i64} {
  func.func @_senet_kernel(%arg0: i32, %arg1: memref<1x8x128xf32, #tpu.memory_space<vmem>>, %arg2: memref<8x2xf32, #tpu.memory_space<vmem>>, %arg3: memref<1x2xf32, #tpu.memory_space<vmem>>, %arg4: memref<2x8xf32, #tpu.memory_space<vmem>>, %arg5: memref<1x8xf32, #tpu.memory_space<vmem>>, %arg6: memref<1x8x128xf32, #tpu.memory_space<vmem>>) attributes {dimension_semantics = [#tpu.dimension_semantics<parallel>], iteration_bounds = array<i64: 2>, scalar_prefetch = 0 : i64, scratch_operands = 0 : i64, tpu.core_type = #tpu.core_type<tc>, window_params = [{transform_indices = @transform_0, window_bounds = array<i64: 1, 8, 128>}, {pipeline_mode = #tpu.pipeline_mode<synchronous>, transform_indices = @transform_1, window_bounds = array<i64: 8, 2>}, {pipeline_mode = #tpu.pipeline_mode<synchronous>, transform_indices = @transform_2, window_bounds = array<i64: 1, 2>}, {pipeline_mode = #tpu.pipeline_mode<synchronous>, transform_indices = @transform_3, window_bounds = array<i64: 2, 8>}, {pipeline_mode = #tpu.pipeline_mode<synchronous>, transform_indices = @transform_4, window_bounds = array<i64: 1, 8>}, {transform_indices = @transform_5, window_bounds = array<i64: 1, 8, 128>}]} {
    %c0 = arith.constant 0 : index
    %c0_0 = arith.constant 0 : index
    %c0_1 = arith.constant 0 : index
    %0 = vector.load %arg1[%c0, %c0_0, %c0_1] : memref<1x8x128xf32, #tpu.memory_space<vmem>>, vector<1x8x128xf32>
    %cst = arith.constant dense<0.000000e+00> : vector<1x8xf32>
    %1 = vector.multi_reduction <add>, %0, %cst [2] : vector<1x8x128xf32> to vector<1x8xf32>
    %c0_2 = arith.constant 0 : index
    %c0_3 = arith.constant 0 : index
    %2 = vector.load %arg2[%c0_2, %c0_3] : memref<8x2xf32, #tpu.memory_space<vmem>>, vector<8x2xf32>
    %cst_4 = arith.constant dense<0.000000e+00> : vector<1x2xf32>
    %3 = tpu.matmul %1, %2, %cst_4 {dimension_numbers = #tpu.dot_dimension_numbers<[1], [0], [0], [1], [0, 0, 1, 1], [], []>} : vector<1x8xf32>, vector<8x2xf32>, vector<1x2xf32> -> vector<1x2xf32>
    %c0_5 = arith.constant 0 : index
    %c0_6 = arith.constant 0 : index
    %4 = vector.load %arg3[%c0_5, %c0_6] : memref<1x2xf32, #tpu.memory_space<vmem>>, vector<1x2xf32>
    %5 = arith.addf %3, %4 : vector<1x2xf32>
    %cst_7 = arith.constant 0.000000e+00 : f32
    %cst_8 = arith.constant 4.000000e+00 : f32
    %6 = vector.broadcast %cst_7 : f32 to vector<1x2xf32>
    %7 = arith.maximumf %6, %5 : vector<1x2xf32>
    %8 = vector.broadcast %cst_8 : f32 to vector<1x2xf32>
    %9 = arith.minimumf %8, %7 : vector<1x2xf32>
    %c0_9 = arith.constant 0 : index
    %c0_10 = arith.constant 0 : index
    %10 = vector.load %arg4[%c0_9, %c0_10] : memref<2x8xf32, #tpu.memory_space<vmem>>, vector<2x8xf32>
    %cst_11 = arith.constant dense<0.000000e+00> : vector<1x8xf32>
    %11 = tpu.matmul %9, %10, %cst_11 {dimension_numbers = #tpu.dot_dimension_numbers<[1], [0], [0], [1], [0, 0, 1, 1], [], []>} : vector<1x2xf32>, vector<2x8xf32>, vector<1x8xf32> -> vector<1x8xf32>
    %c0_12 = arith.constant 0 : index
    %c0_13 = arith.constant 0 : index
    %12 = vector.load %arg5[%c0_12, %c0_13] : memref<1x8xf32, #tpu.memory_space<vmem>>, vector<1x8xf32>
    %13 = arith.addf %11, %12 : vector<1x8xf32>
    %14 = arith.negf %13 : vector<1x8xf32>
    %15 = math.exp %14 : vector<1x8xf32>
    %cst_14 = arith.constant 1.000000e+00 : f32
    %16 = vector.broadcast %cst_14 : f32 to vector<1x8xf32>
    %17 = arith.addf %16, %15 : vector<1x8xf32>
    %18 = arith.divf %16, %17 : vector<1x8xf32>
    %c0_15 = arith.constant 0 : index
    %c0_16 = arith.constant 0 : index
    %c0_17 = arith.constant 0 : index
    %19 = vector.load %arg1[%c0_15, %c0_16, %c0_17] : memref<1x8x128xf32, #tpu.memory_space<vmem>>, vector<1x8x128xf32>
    %20 = vector.shape_cast %18 : vector<1x8xf32> to vector<1x8x1xf32>
    %21 = vector.broadcast %20 : vector<1x8x1xf32> to vector<1x8x128xf32>
    %22 = arith.mulf %19, %21 : vector<1x8x128xf32>
    %c0_18 = arith.constant 0 : index
    %c0_19 = arith.constant 0 : index
    %c0_20 = arith.constant 0 : index
    %23 = vector.load %arg6[%c0_18, %c0_19, %c0_20] : memref<1x8x128xf32, #tpu.memory_space<vmem>>, vector<1x8x128xf32>
    tpu.vector_store %arg6[%c0_18, %c0_19, %c0_20], %22 {strides = array<i32>} : memref<1x8x128xf32, #tpu.memory_space<vmem>>, vector<1x8x128xf32>,
    return
  }
  func.func @transform_0(%arg0: i32) -> (i32, i32, i32) {
    %c0_i32 = arith.constant 0 : i32
    %c0_i32_0 = arith.constant 0 : i32
    %c0_i32_1 = arith.constant 0 : i32
    return %arg0, %c0_i32, %c0_i32_0 : i32, i32, i32
  }
  func.func @transform_1(%arg0: i32) -> (i32, i32) {
    %c0_i32 = arith.constant 0 : i32
    %c0_i32_0 = arith.constant 0 : i32
    %c0_i32_1 = arith.constant 0 : i32
    return %c0_i32, %c0_i32_0 : i32, i32
  }
  func.func @transform_2(%arg0: i32) -> (i32, i32) {
    %c0_i32 = arith.constant 0 : i32
    %c0_i32_0 = arith.constant 0 : i32
    %c0_i32_1 = arith.constant 0 : i32
    return %c0_i32, %c0_i32_0 : i32, i32
  }
  func.func @transform_3(%arg0: i32) -> (i32, i32) {
    %c0_i32 = arith.constant 0 : i32
    %c0_i32_0 = arith.constant 0 : i32
    %c0_i32_1 = arith.constant 0 : i32
    return %c0_i32, %c0_i32_0 : i32, i32
  }
  func.func @transform_4(%arg0: i32) -> (i32, i32) {
    %c0_i32 = arith.constant 0 : i32
    %c0_i32_0 = arith.constant 0 : i32
    %c0_i32_1 = arith.constant 0 : i32
    return %c0_i32, %c0_i32_0 : i32, i32
  }
  func.func @transform_5(%arg0: i32) -> (i32, i32, i32) {
    %c0_i32 = arith.constant 0 : i32
    %c0_i32_0 = arith.constant 0 : i32
    %c0_i32_1 = arith.constant 0 : i32
    return %arg0, %c0_i32, %c0_i32_0 : i32, i32, i32
  }
}

</mosaic_0001>

<llo_original>
// kernel: senet_block.1
$region0: #{senet_block.1}
  #allocation0 [shape = 'u32[]', space=smem, size = 0x4, offset = 0x4, fixed_abs, tag = 'smem constant byte address 0x4 - core index']
  #allocation1 [shape = 'u32[144,128]{1,0:T(1,128)}', space=vmem, size = 0x12000, scoped, tag = 'internal scratch']
  %s0 = inlined_call_operand.vmem [shape: f32[2,8,128], index: 0, kind: input, shape index: {}, may-alias: {0,5}]
  %s1 = inlined_call_operand.vmem [shape: f32[8,2], index: 1, kind: input, shape index: {}]
  %s2 = inlined_call_operand.vmem [shape: f32[1,2], index: 2, kind: input, shape index: {}]
  %s3 = inlined_call_operand.vmem [shape: f32[2,8], index: 3, kind: input, shape index: {}]
  %s4 = inlined_call_operand.vmem [shape: f32[1,8], index: 4, kind: input, shape index: {}]
  %s5 = inlined_call_operand.vmem [shape: f32[2,8,128], index: 5, kind: output, shape index: {}, may-alias: {0,5}]
  %s6 = sld [smem:[#allocation0]]
  $region53: #{senet_block.1} parent=0
    _
  %s8 = ssub.s32 1, %s6
  %s9 = scalar_select 0, %s8, %s6
  loop: start=0, step=1, limit=4
  $region2: #{senet_block.1} parent=0 // loop_pre_header
    _
  $region3: #{senet_block.1} parent=0 // loop_header
    %s11 = sphi 0, %s15
    %p12 = scmp.ge.s32.totalorder %s11, 4
    %s21 = sphi 0, %s23
    %s24 = sphi 0, %s21
    %s25 = sphi 0, %s24
    %s41 = sphi 0, %s25
    %s45 = sphi 0, %s45
    %s47 = sphi 0, %s45
    %s48 = sphi 0, %s47
    %s62 = sphi 0, %s48
    %s66 = sphi 0, %s66
    %s68 = sphi 0, %s66
    %s69 = sphi 0, %s68
    %s83 = sphi 0, %s69
    %s87 = sphi 0, %s87
    %s89 = sphi 0, %s87
    %s90 = sphi 0, %s89
    %s104 = sphi 0, %s90
    %s108 = sphi 0, %s108
    %s110 = sphi 0, %s108
    %s111 = sphi 0, %s110
    %s125 = sphi 0, %s111
    %s131 = sphi 0, %s133
    %s134 = sphi 0, %s131
    %s135 = sphi 0, %s134
    %s151 = sphi 0, %s135
  $region4: #{senet_block.1} parent=0 // loop_header_branch
    %14 = sbr.rel (%p12) target = $region8
  $region5: #{senet_block.1} parent=0 // loop_body
    %s16 = ssub.s32 %s11, 1
    %s17 = ssub.s32 %s11, 2
    %s18 = sadd.s32 %s11, 1
    %s19 = ssub.s32 %s11, %s18
    %p20 = scmp.eq.s32.totalorder %s19, 0
    %s22 = sadd.s32 %s21, 1
    %s23 = scalar_select %p20, %s21, %s22
    %p26 = pneg %p20
    %p27 = scmp.eq.s32.totalorder %s11, 1
    %p28 = por %p26, %p27
    %p29 = scmp.ne.s32.totalorder %s21, %s24
    %p30 = scmp.eq.s32.totalorder %s11, 0
    %p31 = por %p29, %p30
    %p32 = scmp.ne.s32.totalorder %s21, %s24
    %p33 = scmp.eq.s32.totalorder %s16, 1
    %p34 = por %p32, %p33
    %p35 = scmp.ne.s32.totalorder %s24, %s25
    %p36 = scmp.eq.s32.totalorder %s16, 0
    %p37 = por %p35, %p36
    %p38 = scmp.ne.s32.totalorder %s24, %s25
    %p39 = scmp.eq.s32.totalorder %s17, 1
    %p40 = por %p38, %p39
    %p42 = scmp.ne.s32.totalorder %s25, %s41
    %p43 = scmp.eq.s32.totalorder %s17, 0
    %p44 = por %p42, %p43
    %s46 = sadd.s32 %s45, 1
    %p49 = scmp.eq.s32.totalorder %s11, 1
    %p50 = scmp.ne.s32.totalorder %s45, %s47
    %p51 = scmp.eq.s32.totalorder %s11, 0
    %p52 = por %p50, %p51
    %p53 = scmp.ne.s32.totalorder %s45, %s47
    %p54 = scmp.eq.s32.totalorder %s16, 1
    %p55 = por %p53, %p54
    %p56 = scmp.ne.s32.totalorder %s47, %s48
    %p57 = scmp.eq.s32.totalorder %s16, 0
    %p58 = por %p56, %p57
    %p59 = scmp.ne.s32.totalorder %s47, %s48
    %p60 = scmp.eq.s32.totalorder %s17, 1
    %p61 = por %p59, %p60
    %p63 = scmp.ne.s32.totalorder %s48, %s62
    %p64 = scmp.eq.s32.totalorder %s17, 0
    %p65 = por %p63, %p64
    %s67 = sadd.s32 %s66, 1
    %p70 = scmp.eq.s32.totalorder %s11, 1
    %p71 = scmp.ne.s32.totalorder %s66, %s68
    %p72 = scmp.eq.s32.totalorder %s11, 0
    %p73 = por %p71, %p72
    %p74 = scmp.ne.s32.totalorder %s66, %s68
    %p75 = scmp.eq.s32.totalorder %s16, 1
    %p76 = por %p74, %p75
    %p77 = scmp.ne.s32.totalorder %s68, %s69
    %p78 = scmp.eq.s32.totalorder %s16, 0
    %p79 = por %p77, %p78
    %p80 = scmp.ne.s32.totalorder %s68, %s69
    %p81 = scmp.eq.s32.totalorder %s17, 1
    %p82 = por %p80, %p81
    %p84 = scmp.ne.s32.totalorder %s69, %s83
    %p85 = scmp.eq.s32.totalorder %s17, 0
    %p86 = por %p84, %p85
    %s88 = sadd.s32 %s87, 1
    %p91 = scmp.eq.s32.totalorder %s11, 1
    %p92 = scmp.ne.s32.totalorder %s87, %s89
    %p93 = scmp.eq.s32.totalorder %s11, 0
    %p94 = por %p92, %p93
    %p95 = scmp.ne.s32.totalorder %s87, %s89
    %p96 = scmp.eq.s32.totalorder %s16, 1
    %p97 = por %p95, %p96
    %p98 = scmp.ne.s32.totalorder %s89, %s90
    %p99 = scmp.eq.s32.totalorder %s16, 0
    %p100 = por %p98, %p99
    %p101 = scmp.ne.s32.totalorder %s89, %s90
    %p102 = scmp.eq.s32.totalorder %s17, 1
    %p103 = por %p101, %p102
    %p105 = scmp.ne.s32.totalorder %s90, %s104
    %p106 = scmp.eq.s32.totalorder %s17, 0
    %p107 = por %p105, %p106
    %s109 = sadd.s32 %s108, 1
    %p112 = scmp.eq.s32.totalorder %s11, 1
    %p113 = scmp.ne.s32.totalorder %s108, %s110
    %p114 = scmp.eq.s32.totalorder %s11, 0
    %p115 = por %p113, %p114
    %p116 = scmp.ne.s32.totalorder %s108, %s110
    %p117 = scmp.eq.s32.totalorder %s16, 1
    %p118 = por %p116, %p117
    %p119 = scmp.ne.s32.totalorder %s110, %s111
    %p120 = scmp.eq.s32.totalorder %s16, 0
    %p121 = por %p119, %p120
    %p122 = scmp.ne.s32.totalorder %s110, %s111
    %p123 = scmp.eq.s32.totalorder %s17, 1
    %p124 = por %p122, %p123
    %p126 = scmp.ne.s32.totalorder %s111, %s125
    %p127 = scmp.eq.s32.totalorder %s17, 0
    %p128 = por %p126, %p127
    %s129 = ssub.s32 %s11, %s18
    %p130 = scmp.eq.s32.totalorder %s129, 0
    %s132 = sadd.s32 %s131, 1
    %s133 = scalar_select %p130, %s131, %s132
    %p136 = pneg %p130
    %p137 = scmp.eq.s32.totalorder %s11, 1
    %p138 = por %p136, %p137
    %p139 = scmp.ne.s32.totalorder %s131, %s134
    %p140 = scmp.eq.s32.totalorder %s11, 0
    %p141 = por %p139, %p140
    %p142 = scmp.ne.s32.totalorder %s131, %s134
    %p143 = scmp.eq.s32.totalorder %s16, 1
    %p144 = por %p142, %p143
    %p145 = scmp.ne.s32.totalorder %s134, %s135
    %p146 = scmp.eq.s32.totalorder %s16, 0
    %p147 = por %p145, %p146
    %p148 = scmp.ne.s32.totalorder %s134, %s135
    %p149 = scmp.eq.s32.totalorder %s17, 1
    %p150 = por %p148, %p149
    %p152 = scmp.ne.s32.totalorder %s135, %s151
    %p153 = scmp.eq.s32.totalorder %s17, 0
    %p154 = por %p152, %p153
    %p155 = scmp.le.s32.totalorder 1, %s11
    %p156 = scmp.lt.s32.totalorder %s11, 3
    %p157 = pnand %p155, %p156
    %p158 = pneg %p157
    // Predicated region
    $region9: #{senet_block.1} parent=5 // pred_check
      _
    $region10: #{senet_block.1} parent=5 // pred_check_branch
      %160 = sbr.rel (%p157) target = $region12
    $region11: #{senet_block.1} parent=5 // pred_region
      %s161 = ssub.s32 %s11, 1
      // Predicated region
      $region13: #{senet_block.1} parent=11 // pred_check
        %p162 = pneg %p58
      $region14: #{senet_block.1} parent=11 // pred_check_branch
        %164 = sbr.rel (%p162) target = $region16
      $region15: #{senet_block.1} parent=11 // pred_region
        _
      $region16: #{senet_block.1} parent=11 // pred_fallthru
        _
      // Predicated region
      $region17: #{senet_block.1} parent=11 // pred_check
        %p165 = pneg %p79
      $region18: #{senet_block.1} parent=11 // pred_check_branch
        %167 = sbr.rel (%p165) target = $region20
      $region19: #{senet_block.1} parent=11 // pred_region
        _
      $region20: #{senet_block.1} parent=11 // pred_fallthru
        _
      // Predicated region
      $region21: #{senet_block.1} parent=11 // pred_check
        %p168 = pneg %p100
      $region22: #{senet_block.1} parent=11 // pred_check_branch
        %170 = sbr.rel (%p168) target = $region24
      $region23: #{senet_block.1} parent=11 // pred_region
        _
      $region24: #{senet_block.1} parent=11 // pred_fallthru
        _
      // Predicated region
      $region25: #{senet_block.1} parent=11 // pred_check
        %p171 = pneg %p121
      $region26: #{senet_block.1} parent=11 // pred_check_branch
        %173 = sbr.rel (%p171) target = $region28
      $region27: #{senet_block.1} parent=11 // pred_region
        _
      $region28: #{senet_block.1} parent=11 // pred_fallthru
        _
    $region12: #{senet_block.1} parent=5 // pred_fallthru
      _
    %p174 = scmp.lt.s32.totalorder %s11, 2
    // Predicated region
    $region29: #{senet_block.1} parent=5 // pred_check
      %p175 = pneg %p174
    $region30: #{senet_block.1} parent=5 // pred_check_branch
      %177 = sbr.rel (%p175) target = $region32
    $region31: #{senet_block.1} parent=5 // pred_region
      // Predicated region
      $region33: #{senet_block.1} parent=31 // pred_check
        %p178 = pneg %p31
      $region34: #{senet_block.1} parent=31 // pred_check_branch
        %180 = sbr.rel (%p178) target = $region36
      $region35: #{senet_block.1} parent=31 // pred_region
        %p181 = scmp.lt.s32.totalorder %s11, 1
        %s182 = scalar_select %p181, %s11, 1
        %s183 = smul.addr %s182, 8
        %s184 = scalar_lea.vmem %s0, %s183
      $region36: #{senet_block.1} parent=31 // pred_fallthru
        _
    $region32: #{senet_block.1} parent=5 // pred_fallthru
      _
    %p185 = scmp.le.s32.totalorder 1, %s11
    %p186 = scmp.lt.s32.totalorder %s11, 3
    %p187 = pnand %p185, %p186
    %p188 = pneg %p187
    // Predicated region
    $region37: #{senet_block.1} parent=5 // pred_check
      _
    $region38: #{senet_block.1} parent=5 // pred_check_branch
      %190 = sbr.rel (%p187) target = $region40
    $region39: #{senet_block.1} parent=5 // pred_region
      %s191 = ssub.s32 %s11, 1
      %p192 = scmp.lt.s32.totalorder %s16, 1
      %s193 = scalar_select %p192, %s16, 1
      %s194 = smul.addr %s193, 8
      %s195 = scalar_lea.vmem %s0, %s194
      %p196 = pneg %p37
      %p197 = pneg %p34
      %p198 = pneg %p58
      %p199 = pneg %p55
      %p200 = pneg %p79
      %p201 = pneg %p76
      %p202 = pneg %p100
      %p203 = pneg %p97
      %p204 = pneg %p121
      %p205 = pneg %p118
      %p206 = pneg %p147
      %p207 = pneg %p144
      %p208 = scmp.lt.s32.totalorder %s16, 1
      %s209 = scalar_select %p208, %s16, 1
      %s210 = smul.addr %s209, 8
      %s211 = scalar_lea.vmem %s5, %s210
      %p212 = scmp.lt.s32.totalorder %s16, 1
      %s213 = scalar_select %p212, %s16, 1
      %s214 = smul.addr %s213, 8
      %s215 = scalar_lea.vmem %s0, %s214
      %p216 = scmp.lt.s32.totalorder %s16, 1
      %s217 = scalar_select %p216, %s16, 1
      %s218 = smul.addr %s217, 8
      %s219 = scalar_lea.vmem %s5, %s218
      %v220 = vld [vmem:[%s215] sm:$0xff]
      %221 = vadd.xlane.f32.xlu0 %v220
      %v222 = vpop.xlane.xlu0 %221
      %v223 = vld [vmem:[%s1] sm:$0xff]
      %v224 = vld [vmem:[%s2] sm:$0x1]
      %v226 = vlaneseq
      %v227 = vand.u32 %v226, 127
      %v228 = vlaneseq
      %v229 = vshrl.u32 %v228, 7
      %v230 = vsub.s32 %v227, %v229
      %v231 = vrot.slane %v222, %v230
      %vm232 = vcmask 64512
      %v233 = vsel %vm232, %v231, 0
      %235 = vmatprep.subr.mxu0 0.0
      %236 = vmatpush1.msra.mxu0 %v223
      %237 = vmatprep.subr.mxu0 0.0
      %238 = vmatpush1.msra.mxu0 0.0
      %239 = vmatprep.subr.mxu0 0.0
      %240 = vmatpush1.msra.mxu0 0.0
      %241 = vmatprep.subr.mxu0 0.0
      %242 = vmatpush1.msra.mxu0 0.0
      %243 = vmatprep.subr.mxu0 0.0
      %244 = vmatpush1.msra.mxu0 0.0
      %245 = vmatprep.subr.mxu0 0.0
      %246 = vmatpush1.msra.mxu0 0.0
      %247 = vmatprep.subr.mxu0 0.0
      %248 = vmatpush1.msra.mxu0 0.0
      %249 = vmatprep.subr.mxu0 0.0
      %250 = vmatpush1.msra.mxu0 0.0
      %251 = vmatprep.subr.mxu0 0.0
      %252 = vmatpush1.msra.mxu0 0.0
      %253 = vmatprep.subr.mxu0 0.0
      %254 = vmatpush1.msra.mxu0 0.0
      %255 = vmatprep.subr.mxu0 0.0
      %256 = vmatpush1.msra.mxu0 0.0
      %257 = vmatprep.subr.mxu0 0.0
      %258 = vmatpush1.msra.mxu0 0.0
      %259 = vmatprep.subr.mxu0 0.0
      %260 = vmatpush1.msra.mxu0 0.0
      %261 = vmatprep.subr.mxu0 0.0
      %262 = vmatpush1.msra.mxu0 0.0
      %263 = vmatprep.subr.mxu0 0.0
      %264 = vmatpush1.msra.mxu0 0.0
      %265 = vmatprep.subr.mxu0 0.0
      %266 = vmatpush1.msra.mxu0 0.0
      %267 = vmatprep.subr.mxu0 0.0
      %268 = vmatpush1.msra.mxu0 0.0
      %269 = vmatprep.subr.mxu0 0.0
      %270 = vmatpush1.msra.mxu0 0.0
      %271 = vmatprep.subr.mxu0 0.0
      %272 = vmatpush1.msra.mxu0 0.0
      %273 = vmatprep.subr.mxu0 0.0
      %274 = vmatpush1.msra.mxu0 0.0
      %275 = vmatprep.subr.mxu0 0.0
      %276 = vmatpush1.msra.mxu0 0.0
      %277 = vmatprep.subr.mxu0 0.0
      %278 = vmatpush1.msra.mxu0 0.0
      %279 = vmatprep.subr.mxu0 0.0
      %280 = vmatpush1.msra.mxu0 0.0
      %281 = vmatprep.subr.mxu0 0.0
      %282 = vmatpush1.msra.mxu0 0.0
      %283 = vmatprep.subr.mxu0 0.0
      %284 = vmatpush1.msra.mxu0 0.0
      %285 = vmatprep.subr.mxu0 0.0
      %286 = vmatpush1.msra.mxu0 0.0
      %287 = vmatprep.subr.mxu0 0.0
      %288 = vmatpush1.msra.mxu0 0.0
      %289 = vmatprep.subr.mxu0 0.0
      %290 = vmatpush1.msra.mxu0 0.0
      %291 = vmatprep.subr.mxu0 0.0
      %292 = vmatpush1.msra.mxu0 0.0
      %293 = vmatprep.subr.mxu0 0.0
      %294 = vmatpush1.msra.mxu0 0.0
      %295 = vmatprep.subr.mxu0 0.0
      %296 = vmatpush1.msra.mxu0 0.0
      %297 = vmatprep.subr.mxu0 0.0
      %298 = vmatpush1.msra.mxu0 0.0
      %299 = vmatprep.mubr.f32.mxu0 0.0
      %300 = vmatmul.mubr.f32.gmra.mrb[0].mxu0 %v233
      %v301 = vpop.f32.mrb[0].mxu0
      %v302 = vadd.f32 %v224, %v301
      %v303 = vpop.f32.mrb[0].mxu0
      %304 = vdwg.mxu0
      %v305 = vmax.f32 %v302, 0.0
      %v306 = vmin.f32 %v305, 4.0
      %v307 = vld [vmem:[%s3] sm:$0x3]
      %v308 = vld [vmem:[%s4] sm:$0x1]
      %vm309 = vcmask 15360
      %v311 = vsel %vm309, %v306, 0
      %vm313 = vcmask 1041408
      %v315 = vsel %vm313, %v307, 0
      %317 = vmatprep.subr.mxu0 0.0
      %318 = vmatpush1.msra.mxu0 %v315
      %319 = vmatprep.subr.mxu0 0.0
      %320 = vmatpush1.msra.mxu0 0.0
      %321 = vmatprep.subr.mxu0 0.0
      %322 = vmatpush1.msra.mxu0 0.0
      %323 = vmatprep.subr.mxu0 0.0
      %324 = vmatpush1.msra.mxu0 0.0
      %325 = vmatprep.subr.mxu0 0.0
      %326 = vmatpush1.msra.mxu0 0.0
      %327 = vmatprep.subr.mxu0 0.0
      %328 = vmatpush1.msra.mxu0 0.0
      %329 = vmatprep.subr.mxu0 0.0
      %330 = vmatpush1.msra.mxu0 0.0
      %331 = vmatprep.subr.mxu0 0.0
      %332 = vmatpush1.msra.mxu0 0.0
      %333 = vmatprep.subr.mxu0 0.0
      %334 = vmatpush1.msra.mxu0 0.0
      %335 = vmatprep.subr.mxu0 0.0
      %336 = vmatpush1.msra.mxu0 0.0
      %337 = vmatprep.subr.mxu0 0.0
      %338 = vmatpush1.msra.mxu0 0.0
      %339 = vmatprep.subr.mxu0 0.0
      %340 = vmatpush1.msra.mxu0 0.0
      %341 = vmatprep.subr.mxu0 0.0
      %342 = vmatpush1.msra.mxu0 0.0
      %343 = vmatprep.subr.mxu0 0.0
      %344 = vmatpush1.msra.mxu0 0.0
      %345 = vmatprep.subr.mxu0 0.0
      %346 = vmatpush1.msra.mxu0 0.0
      %347 = vmatprep.subr.mxu0 0.0
      %348 = vmatpush1.msra.mxu0 0.0
      %349 = vmatprep.subr.mxu0 0.0
      %350 = vmatpush1.msra.mxu0 0.0
      %351 = vmatprep.subr.mxu0 0.0
      %352 = vmatpush1.msra.mxu0 0.0
      %353 = vmatprep.subr.mxu0 0.0
      %354 = vmatpush1.msra.mxu0 0.0
      %355 = vmatprep.subr.mxu0 0.0
      %356 = vmatpush1.msra.mxu0 0.0
      %357 = vmatprep.subr.mxu0 0.0
      %358 = vmatpush1.msra.mxu0 0.0
      %359 = vmatprep.subr.mxu0 0.0
      %360 = vmatpush1.msra.mxu0 0.0
      %361 = vmatprep.subr.mxu0 0.0
      %362 = vmatpush1.msra.mxu0 0.0
      %363 = vmatprep.subr.mxu0 0.0
      %364 = vmatpush1.msra.mxu0 0.0
      %365 = vmatprep.subr.mxu0 0.0
      %366 = vmatpush1.msra.mxu0 0.0
      %367 = vmatprep.subr.mxu0 0.0
      %368 = vmatpush1.msra.mxu0 0.0
      %369 = vmatprep.subr.mxu0 0.0
      %370 = vmatpush1.msra.mxu0 0.0
      %371 = vmatprep.subr.mxu0 0.0
      %372 = vmatpush1.msra.mxu0 0.0
      %373 = vmatprep.subr.mxu0 0.0
      %374 = vmatpush1.msra.mxu0 0.0
      %375 = vmatprep.subr.mxu0 0.0
      %376 = vmatpush1.msra.mxu0 0.0
      %377 = vmatprep.subr.mxu0 0.0
      %378 = vmatpush1.msra.mxu0 0.0
      %379 = vmatprep.subr.mxu0 0.0
      %380 = vmatpush1.msra.mxu0 0.0
      %381 = vmatprep.mubr.f32.mxu0 0.0
      %382 = vmatmul.mubr.f32.gmra.mrb[0].mxu0 %v311
      %v383 = vpop.f32.mrb[0].mxu0
      %v384 = vadd.f32 %v308, %v383
      %v385 = vpop.f32.mrb[0].mxu0
      %386 = vdwg.mxu0
      %v387 = vxor.u32 %v384, 2147483648
      %v388 = vmul.f32 %v387, 1.442695
      %v389 = vpow.pop %v388
      %v390 = vadd.f32 %v389, 1.0
      %v391 = vrcp.pop %v390
      %v392 = vmul.f32 1.0, %v391
      %v393 = vlaneseq
      %v394 = vshrl.u32 %v393, 7
      %v395 = vsub.s32 0, %v394
      %v396 = vrot.slane %v392, %v395
      %398 = vbcast.lane.b32.xlu0 %v396, 256
      %v399 = vpop.permute.xlu0 %398
      %v400 = vmul.f32 %v220, %v399
      %401 = vst [vmem:[%s219] sm:$0xff] %v400
      %p402 = scmp.lt.s32.totalorder %s16, 1
      %s403 = scalar_select %p402, %s16, 1
      %s404 = smul.addr %s403, 8
      %s405 = scalar_lea.vmem %s5, %s404
      // Predicated region
      $region41: #{senet_block.1} parent=39 // pred_check
        %p406 = pneg %p144
      $region42: #{senet_block.1} parent=39 // pred_check_branch
        %408 = sbr.rel (%p406) target = $region44
      $region43: #{senet_block.1} parent=39 // pred_region
        _
      $region44: #{senet_block.1} parent=39 // pred_fallthru
        _
    $region40: #{senet_block.1} parent=5 // pred_fallthru
      _
    %p409 = scmp.le.s32.totalorder 2, %s11
    // Predicated region
    $region45: #{senet_block.1} parent=5 // pred_check
      %p410 = pneg %p409
    $region46: #{senet_block.1} parent=5 // pred_check_branch
      %412 = sbr.rel (%p410) target = $region48
    $region47: #{senet_block.1} parent=5 // pred_region
      %s413 = ssub.s32 %s11, 2
      // Predicated region
      $region49: #{senet_block.1} parent=47 // pred_check
        %p414 = pneg %p150
      $region50: #{senet_block.1} parent=47 // pred_check_branch
        %416 = sbr.rel (%p414) target = $region52
      $region51: #{senet_block.1} parent=47 // pred_region
        %p417 = scmp.lt.s32.totalorder %s17, 1
        %s418 = scalar_select %p417, %s17, 1
        %s419 = smul.addr %s418, 8
        %s420 = scalar_lea.vmem %s5, %s419
      $region52: #{senet_block.1} parent=47 // pred_fallthru
        _
    $region48: #{senet_block.1} parent=5 // pred_fallthru
      _
  $region6: #{senet_block.1} parent=0 // loop_footer
    %s15 = sadd.s32 1, %s11
  $region7: #{senet_block.1} parent=0 // loop_footer_branch
    %10 = sbr.rel target = $region3
  $region8: #{senet_block.1} parent=0 // loop_exit
    _

</llo_original>
